<compile_context>
chip_gen: v7x
topology: tpu7x:2x2x1
jax: 0.10.0
libtpu: 0.0.40
codegen_flags: <defaults>
</compile_context>

<pallas_src>
import functools

import jax
import jax.numpy as jnp
from jax.experimental import pallas as pl
from jax.experimental.pallas import tpu as pltpu

L_CENTER = 50.0
L_RANGE = 100.0
BN_EPS = 1e-5

_M_TARGET_FUSED = 1024      # target M (= row_block * padded_width) per fused step


def _round_up(x, m):
    return (x + m - 1) // m * m


def _tpu_plan():
    """Generation-aware tile / VMEM plan (v7x: 64 MiB VMEM, v5e/v6e: 128 MiB)."""
    try:
        kind = jax.devices()[0].device_kind.lower()
    except Exception:
        kind = ""
    if "v7" in kind or "7x" in kind:
        return 1024, 48 * 1024 * 1024
    if "v5" in kind or "v6" in kind:
        return 2048, 96 * 1024 * 1024
    return 1024, None


_TM_MAX, _VMEM_LIMIT = _tpu_plan()


def _compiler_params(semantics):
    kw = dict(dimension_semantics=semantics)
    if _VMEM_LIMIT is not None:
        kw["vmem_limit_bytes"] = _VMEM_LIMIT
    return pltpu.CompilerParams(**kw)


# ---------------------------------------------------------------------------
# Kernel 1: full-K matmul with fused bias -> ReLU -> BN-shift epilogue
# (weights are a single VMEM-resident block; no accumulator scratch needed)
# ---------------------------------------------------------------------------
def _matmul_epilogue_kernel(a_ref, b_ref, bias_ref, shift_ref, o_ref, *, apply_relu):
    z = jnp.dot(a_ref[...], b_ref[...], preferred_element_type=jnp.float32)
    z = z + bias_ref[...]                     # conv bias (BN scale pre-folded)
    if apply_relu:
        z = jnp.maximum(z, 0.0)
    z = z + shift_ref[...]                    # BN additive shift (post-ReLU)
    o_ref[...] = z.astype(o_ref.dtype)


def _choose_tm(m):
    if m >= 2 * _TM_MAX:
        return _TM_MAX
    if m >= 16:                               # >= 2 M blocks for megacore
        return min(_TM_MAX, _round_up((m + 1) // 2, 8))
    return _round_up(max(m, 1), 8)


def matmul_bias_act(a, w2, bias, shift, apply_relu, out_dtype):
    """a: (M, K) bf16, w2: (K, Np) bf16 (Np multiple of 128), bias/shift: (1, Np)."""
    m, k = a.shape
    k2, np_ = w2.shape
    assert k == k2
    tm = _choose_tm(m)
    return pl.pallas_call(
        functools.partial(_matmul_epilogue_kernel, apply_relu=apply_relu),
        out_shape=jax.ShapeDtypeStruct((m, np_), out_dtype),
        grid=(pl.cdiv(m, tm),),
        in_specs=[
            pl.BlockSpec((tm, k), lambda i: (i, 0)),        # patches stream over M
            pl.BlockSpec((k, np_), lambda i: (0, 0)),       # weights VMEM-resident
            pl.BlockSpec((1, np_), lambda i: (0, 0)),
            pl.BlockSpec((1, np_), lambda i: (0, 0)),
        ],
        out_specs=pl.BlockSpec((tm, np_), lambda i: (i, 0)),
        compiler_params=_compiler_params(("parallel",)),
    )(a, w2, bias, shift)


# ---------------------------------------------------------------------------
# Kernel 2: fused stride-1 conv straight from the NHWC activation
# (manual halo'd row-block DMA; kh*kw tap matmuls accumulated in f32)
# ---------------------------------------------------------------------------
def _fused_conv_kernel(xp_ref, w_ref, bias_ref, shift_ref, o_ref, xbuf, sem,
                       *, kh, kw, dil, rb, wp, hp, apply_relu):
    ni = pl.program_id(0)                     # image index
    ri = pl.program_id(1)                     # output row-block index
    rows = rb + dil * (kh - 1)                # row block + vertical halo
    start = (ni * hp + ri * rb) * wp          # flat row into (N*Hp*Wp, Cin)
    cp = pltpu.make_async_copy(
        xp_ref.at[pl.ds(start, rows * wp)],
        xbuf.at[pl.ds(0, rows * wp)],
        sem.at[0],
    )
    cp.start()
    cp.wait()

    msize = rb * wp                           # M' = row block * padded width
    acc = None
    for dy in range(kh):
        for dx in range(kw):
            off = (dy * wp + dx) * dil        # static tap offset into the buffer
            tap = xbuf[pl.ds(off, msize), :]  # (M', Cin) window, no im2col copy in HBM
            part = jnp.dot(tap, w_ref[dy * kw + dx],
                           preferred_element_type=jnp.float32)
            acc = part if acc is None else acc + part

    z = acc + bias_ref[...]
    if apply_relu:
        z = jnp.maximum(z, 0.0)
    z = z + shift_ref[...]
    o_ref[...] = z.astype(o_ref.dtype)


def _choose_rb(hout, wp, wout):
    cands = [d for d in range(1, hout + 1)
             if hout % d == 0 and (d * wp) % 8 == 0]
    if not cands:
        return None
    small = [d for d in cands if d * wout <= _M_TARGET_FUSED]
    multi = [d for d in small if hout // d >= 2]       # >=2 row blocks (megacore)
    if multi:
        return max(multi)
    if small:
        return max(small)
    return min(cands)


def fused_conv2d(x, w3, bias, shift, *, kh, kw, dil, relu, cout, out_dtype, pads):
    """Stride-1 conv without HBM im2col.  pads = ((top, bottom), (left, right)).

    Returns (N, Hout, Wout, cout), or None if the shape cannot be tiled (the
    caller then falls back to the im2col + matmul path)."""
    n, h, w, cin = x.shape
    (pt, pb), (pl_, pr) = pads
    hout = h + pt + pb - dil * (kh - 1)
    wout = w + pl_ + pr - dil * (kw - 1)
    wp = w + pl_ + pr
    hp = hout + dil * (kh - 1)
    if hout <= 0 or wout <= 0 or cin % 8 != 0:
        return None
    rb = _choose_rb(hout, wp, wout)
    if rb is None:
        return None

    co_pad = w3.shape[-1]
    rows = rb + dil * (kh - 1)
    xbuf_rows = _round_up(rows * wp + dil * (kw - 1), 8)

    xp = jnp.pad(x, ((0, 0), (pt, pb), (pl_, pr), (0, 0)))
    xp_flat = xp.reshape(n * hp * wp, cin)
    n_rblocks = hout // rb

    kernel = functools.partial(
        _fused_conv_kernel, kh=kh, kw=kw, dil=dil, rb=rb, wp=wp, hp=hp,
        apply_relu=relu)

    out_flat = pl.pallas_call(
        kernel,
        out_shape=jax.ShapeDtypeStruct((n * hout * wp, co_pad), out_dtype),
        grid=(n, n_rblocks),
        in_specs=[
            pl.BlockSpec(memory_space=pl.ANY),                        # manual DMA
            pl.BlockSpec((kh * kw, cin, co_pad), lambda ni, ri: (0, 0, 0)),
            pl.BlockSpec((1, co_pad), lambda ni, ri: (0, 0)),
            pl.BlockSpec((1, co_pad), lambda ni, ri: (0, 0)),
        ],
        out_specs=pl.BlockSpec((rb * wp, co_pad),
                               lambda ni, ri: (ni * n_rblocks + ri, 0)),
        scratch_shapes=[
            pltpu.VMEM((xbuf_rows, cin), jnp.bfloat16),
            pltpu.SemaphoreType.DMA((1,)),
        ],
        compiler_params=_compiler_params(("parallel", "parallel")),
    )(xp_flat, w3, bias, shift)

    out = out_flat.reshape(n, hout, wp, co_pad)
    # columns >= wout / channels >= cout are scratch columns; crop them here.
    return out[:, :, :wout, :cout]


# ---------------------------------------------------------------------------
# im2col glue (only for the stride-2 layers, the Cin=1 first conv and fallbacks)
# ---------------------------------------------------------------------------
def im2col(x, k, stride, pad, dil):
    n, h, w, c = x.shape
    xp = jnp.pad(x, ((0, 0), (pad, pad), (pad, pad), (0, 0)))
    h_out = (h + 2 * pad - dil * (k - 1) - 1) // stride + 1
    w_out = (w + 2 * pad - dil * (k - 1) - 1) // stride + 1
    taps = []
    for dy in range(k):
        for dx in range(k):
            ys, xs = dy * dil, dx * dil
            sl = xp[:, ys:ys + stride * (h_out - 1) + 1:stride,
                    xs:xs + stride * (w_out - 1) + 1:stride, :]
            taps.append(sl)
    cols = jnp.concatenate(taps, axis=-1)
    return cols.reshape(n * h_out * w_out, k * k * c), (n, h_out, w_out)


def conv2d(x, p):
    n, h, w_, cin = x.shape
    k, s, pad, dil = p["k"], p["stride"], p["pad"], p["dil"]
    cout, co_pad = p["cout"], p["co_pad"]

    if k == 1 and s == 1 and pad == 0:                    # 1x1 head: plain matmul
        cols = x.reshape(n * h * w_, cin)
        out = matmul_bias_act(cols, p["w3"].reshape(cin, co_pad), p["bias"],
                              p["shift"], p["relu"], p["out_dtype"])
        return out[:, :cout].reshape(n, h, w_, cout)

    if s == 1:                                            # fused, no HBM im2col
        y = fused_conv2d(x, p["w3"], p["bias"], p["shift"], kh=k, kw=k, dil=dil,
                         relu=p["relu"], cout=cout, out_dtype=p["out_dtype"],
                         pads=((pad, pad), (pad, pad)))
        if y is not None:
            return y

    # Fallback: im2col + full-K matmul (stride-2 layers, Cin=1 conv1, odd shapes).
    cols, (n2, ho, wo) = im2col(x, k, s, pad, dil)
    out = matmul_bias_act(cols, p["w3"].reshape(k * k * cin, co_pad), p["bias"],
                          p["shift"], p["relu"], p["out_dtype"])
    return out[:, :cout].reshape(n2, ho, wo, cout)


def conv_transpose2d(x, p):
    """ConvTranspose2d(k=4, stride=2, pad=1) via four sub-pixel 2x2 convs."""
    n, h, w_, cin = x.shape
    cout, co_pad = p["cout"], p["co_pad"]
    subs = []
    for r in range(2):
        row = []
        for s_ in range(2):
            w3 = p["w3s"][(r, s_)]
            y = fused_conv2d(x, w3, p["bias"], p["shift"], kh=2, kw=2, dil=1,
                             relu=p["relu"], cout=cout, out_dtype=p["out_dtype"],
                             pads=((1 - r, r), (1 - s_, s_)))
            if y is None:
                xp = jnp.pad(x, ((0, 0), (1 - r, r), (1 - s_, s_), (0, 0)))
                cols, (n2, ho, wo) = im2col(xp, 2, 1, 0, 1)
                ym = matmul_bias_act(cols, w3.reshape(4 * cin, co_pad),
                                     p["bias"], p["shift"], p["relu"],
                                     p["out_dtype"])
                y = ym[:, :cout].reshape(n2, ho, wo, cout)
            row.append(y)
        subs.append(row)
    stacked = jnp.stack([jnp.stack(row, axis=0) for row in subs], axis=0)
    out = jnp.transpose(stacked, (2, 3, 0, 4, 1, 5))      # (n, h, 2, w, 2, c)
    return out.reshape(n, 2 * h, 2 * w_, cout)


# ---------------------------------------------------------------------------
# Parameter construction + one-time weight prep (hoisted out of the forward)
# ---------------------------------------------------------------------------
# (kind, cin, cout, k, stride, pad, dilation, relu, bn-after-relu)
_LAYER_SPEC = [
    # conv1
    ("conv", 1, 64, 3, 1, 1, 1, True, False),
    ("conv", 64, 64, 3, 2, 1, 1, True, True),
    # conv2
    ("conv", 64, 128, 3, 1, 1, 1, True, False),
    ("conv", 128, 128, 3, 2, 1, 1, True, True),
    # conv3
    ("conv", 128, 256, 3, 1, 1, 1, True, False),
    ("conv", 256, 256, 3, 1, 1, 1, True, False),
    ("conv", 256, 256, 3, 2, 1, 1, True, True),
    # conv4
    ("conv", 256, 512, 3, 1, 1, 1, True, False),
    ("conv", 512, 512, 3, 1, 1, 1, True, False),
    ("conv", 512, 512, 3, 1, 1, 1, True, True),
    # conv5
    ("conv", 512, 512, 3, 1, 2, 2, True, False),
    ("conv", 512, 512, 3, 1, 2, 2, True, False),
    ("conv", 512, 512, 3, 1, 2, 2, True, True),
    # conv6
    ("conv", 512, 512, 3, 1, 2, 2, True, False),
    ("conv", 512, 512, 3, 1, 2, 2, True, False),
    ("conv", 512, 512, 3, 1, 2, 2, True, True),
    # conv7
    ("conv", 512, 512, 3, 1, 1, 1, True, False),
    ("conv", 512, 512, 3, 1, 1, 1, True, False),
    ("conv", 512, 512, 3, 1, 1, 1, True, True),
    # conv8
    ("deconv", 512, 256, 4, 2, 1, 1, True, False),
    ("conv", 256, 256, 3, 1, 1, 1, True, False),
    ("conv", 256, 256, 3, 1, 1, 1, True, False),
    # softmax head (1x1 conv, no activation)
    ("conv", 256, 326, 1, 1, 0, 1, False, False),
]


def _pad_vec(v, co_pad):
    v = jnp.pad(v, (0, co_pad - v.shape[0]))
    return v.reshape(1, co_pad).astype(jnp.float32)


def _prep_conv(w_oihw, bias, scale, shift, co_pad):
    cout, cin, kh, kw = w_oihw.shape
    w3 = jnp.transpose(w_oihw, (2, 3, 1, 0)).reshape(kh * kw, cin, cout)
    w3 = w3 * scale[None, None, :]            # fold BN scale (>0) into weights
    w3 = jnp.pad(w3, ((0, 0), (0, 0), (0, co_pad - cout))).astype(jnp.bfloat16)
    return w3, _pad_vec(bias * scale, co_pad), _pad_vec(shift, co_pad)


def _prep_deconv(wt, bias, scale, shift, co_pad):
    cin, cout, kh, kw = wt.shape
    assert (kh, kw) == (4, 4), "sub-pixel decomposition assumes k=4, stride=2, pad=1"
    w3s = {}
    for r in range(2):
        for s_ in range(2):
            ky = [3 - r - 2 * dy for dy in range(2)]
            kx = [3 - s_ - 2 * dx for dx in range(2)]
            w_sub = wt[:, :, ky, :][:, :, :, kx]                  # (cin, cout, 2, 2)
            w3 = jnp.transpose(w_sub, (2, 3, 0, 1)).reshape(4, cin, cout)
            w3 = w3 * scale[None, None, :]
            w3s[(r, s_)] = jnp.pad(
                w3, ((0, 0), (0, 0), (0, co_pad - cout))).astype(jnp.bfloat16)
    return w3s, _pad_vec(bias * scale, co_pad), _pad_vec(shift, co_pad)


def init_colorizer_params(key):
    params = []
    last = len(_LAYER_SPEC) - 1
    for idx, (kind, cin, cout, k, s, p_, d, relu, bn) in enumerate(_LAYER_SPEC):
        key, kw_, kb_ = jax.random.split(key, 3)
        fan_in = cin * k * k
        std = (2.0 / fan_in) ** 0.5
        if kind == "conv":
            w = jax.random.normal(kw_, (cout, cin, k, k), jnp.float32) * std
        else:  # ConvTranspose2d weight layout: (cin, cout, k, k)
            w = jax.random.normal(kw_, (cin, cout, k, k), jnp.float32) * std
        b = jax.random.normal(kb_, (cout,), jnp.float32) * 0.01
        if bn:  # eval-mode BN, default running stats -> per-channel affine
            scale = jnp.full((cout,), 1.0 / (1.0 + BN_EPS) ** 0.5, jnp.float32)
            shift = jnp.zeros((cout,), jnp.float32)
        else:
            scale = jnp.ones((cout,), jnp.float32)
            shift = jnp.zeros((cout,), jnp.float32)
        out_dtype = jnp.float32 if idx == last else jnp.bfloat16
        co_pad = _round_up(max(cout, 128), 128)          # lane-dense output channels
        common = dict(k=k, stride=s, pad=p_, dil=d, relu=relu, cin=cin,
                      cout=cout, co_pad=co_pad, out_dtype=out_dtype)
        if kind == "conv":
            w3, bq, sh = _prep_conv(w, b, scale, shift, co_pad)
            params.append(dict(kind="conv", w3=w3, bias=bq, shift=sh, **common))
        else:
            w3s, bq, sh = _prep_deconv(w, b, scale, shift, co_pad)
            params.append(dict(kind="deconv", w3s=w3s, bias=bq, shift=sh, **common))
    return params


# ---------------------------------------------------------------------------
# Full forward pass
# ---------------------------------------------------------------------------
def colorizer_forward(params, x_nchw):
    # normalize_l kept element-wise (border-correct w.r.t. conv1 zero padding).
    x = (x_nchw - L_CENTER) / L_RANGE
    x = jnp.transpose(x, (0, 2, 3, 1)).astype(jnp.bfloat16)      # NCHW -> NHWC
    for p in params:
        if p["kind"] == "conv":
            x = conv2d(x, p)
        else:
            x = conv_transpose2d(x, p)
    return jnp.transpose(x, (0, 3, 1, 2)).astype(jnp.float32)    # (N, 326, H/4, W/4)


if __name__ == "__main__":
    key = jax.random.PRNGKey(0)
    key, pkey, xkey = jax.random.split(key, 3)
    params = init_colorizer_params(pkey)

    # L channel of a Lab image, values in [0, 100]; NCHW like the PyTorch module.
    x = jax.random.uniform(xkey, (2, 1, 16, 16), jnp.float32, 0.0, 100.0)

    out = colorizer_forward(params, x)
    out = jax.block_until_ready(out)

    assert out.shape == (2, 326, 4, 4), out.shape
    assert bool(jnp.all(jnp.isfinite(out)))
    print("KERNEL_OK")
</pallas_src>

<mosaic_0001>
module attributes {stable_mosaic.version = 11 : i64} {
  func.func @_matmul_epilogue_kernel(%arg0: i32, %arg1: memref<256x9xbf16, #tpu.memory_space<vmem>>, %arg2: memref<9x128xbf16, #tpu.memory_space<vmem>>, %arg3: memref<1x128xf32, #tpu.memory_space<vmem>>, %arg4: memref<1x128xf32, #tpu.memory_space<vmem>>, %arg5: memref<256x128xbf16, #tpu.memory_space<vmem>>) attributes {dimension_semantics = [#tpu.dimension_semantics<parallel>], iteration_bounds = array<i64: 2>, scalar_prefetch = 0 : i64, scratch_operands = 0 : i64, tpu.core_type = #tpu.core_type<tc>, window_params = [{transform_indices = @transform_0, window_bounds = array<i64: 256, 9>}, {pipeline_mode = #tpu.pipeline_mode<synchronous>, transform_indices = @transform_1, window_bounds = array<i64: 9, 128>}, {pipeline_mode = #tpu.pipeline_mode<synchronous>, transform_indices = @transform_2, window_bounds = array<i64: 1, 128>}, {pipeline_mode = #tpu.pipeline_mode<synchronous>, transform_indices = @transform_3, window_bounds = array<i64: 1, 128>}, {transform_indices = @transform_4, window_bounds = array<i64: 256, 128>}]} {
    %c0 = arith.constant 0 : index
    %c0_0 = arith.constant 0 : index
    %0 = vector.load %arg1[%c0, %c0_0] : memref<256x9xbf16, #tpu.memory_space<vmem>>, vector<256x9xbf16>
    %c0_1 = arith.constant 0 : index
    %c0_2 = arith.constant 0 : index
    %1 = vector.load %arg2[%c0_1, %c0_2] : memref<9x128xbf16, #tpu.memory_space<vmem>>, vector<9x128xbf16>
    %cst = arith.constant dense<0.000000e+00> : vector<256x128xf32>
    %2 = tpu.matmul %0, %1, %cst {dimension_numbers = #tpu.dot_dimension_numbers<[1], [0], [0], [1], [0, 0, 1, 1], [], []>} : vector<256x9xbf16>, vector<9x128xbf16>, vector<256x128xf32> -> vector<256x128xf32>
    %c0_3 = arith.constant 0 : index
    %c0_4 = arith.constant 0 : index
    %3 = vector.load %arg3[%c0_3, %c0_4] : memref<1x128xf32, #tpu.memory_space<vmem>>, vector<1x128xf32>
    %4 = vector.broadcast %3 : vector<1x128xf32> to vector<256x128xf32>
    %5 = arith.addf %2, %4 : vector<256x128xf32>
    %cst_5 = arith.constant 0.000000e+00 : f32
    %6 = vector.broadcast %cst_5 : f32 to vector<256x128xf32>
    %7 = arith.maximumf %5, %6 : vector<256x128xf32>
    %c0_6 = arith.constant 0 : index
    %c0_7 = arith.constant 0 : index
    %8 = vector.load %arg4[%c0_6, %c0_7] : memref<1x128xf32, #tpu.memory_space<vmem>>, vector<1x128xf32>
    %9 = vector.broadcast %8 : vector<1x128xf32> to vector<256x128xf32>
    %10 = arith.addf %7, %9 : vector<256x128xf32>
    %11 = arith.truncf %10 : vector<256x128xf32> to vector<256x128xbf16>
    %c0_8 = arith.constant 0 : index
    %c0_9 = arith.constant 0 : index
    %12 = vector.load %arg5[%c0_8, %c0_9] : memref<256x128xbf16, #tpu.memory_space<vmem>>, vector<256x128xbf16>
    tpu.vector_store %arg5[%c0_8, %c0_9], %11 {strides = array<i32>} : memref<256x128xbf16, #tpu.memory_space<vmem>>, vector<256x128xbf16>,
    return
  }
  func.func @transform_0(%arg0: i32) -> (i32, i32) {
    %c0_i32 = arith.constant 0 : i32
    %c0_i32_0 = arith.constant 0 : i32
    return %arg0, %c0_i32 : i32, i32
  }
  func.func @transform_1(%arg0: i32) -> (i32, i32) {
    %c0_i32 = arith.constant 0 : i32
    %c0_i32_0 = arith.constant 0 : i32
    %c0_i32_1 = arith.constant 0 : i32
    return %c0_i32, %c0_i32_0 : i32, i32
  }
  func.func @transform_2(%arg0: i32) -> (i32, i32) {
    %c0_i32 = arith.constant 0 : i32
    %c0_i32_0 = arith.constant 0 : i32
    %c0_i32_1 = arith.constant 0 : i32
    return %c0_i32, %c0_i32_0 : i32, i32
  }
  func.func @transform_3(%arg0: i32) -> (i32, i32) {
    %c0_i32 = arith.constant 0 : i32
    %c0_i32_0 = arith.constant 0 : i32
    %c0_i32_1 = arith.constant 0 : i32
    return %c0_i32, %c0_i32_0 : i32, i32
  }
  func.func @transform_4(%arg0: i32) -> (i32, i32) {
    %c0_i32 = arith.constant 0 : i32
    %c0_i32_0 = arith.constant 0 : i32
    return %arg0, %c0_i32 : i32, i32
  }
}

</mosaic_0001>

<llo_original>
// kernel: tpu_custom_call.1
$region0: #{tpu_custom_call.1}
  #allocation0 [shape = 'u32[]', space=smem, size = 0x4, offset = 0x4, fixed_abs, tag = 'smem constant byte address 0x4 - core index']
  #allocation1 [shape = 'u32[144,128]{1,0:T(1,128)}', space=vmem, size = 0x12000, scoped, tag = 'internal scratch']
  %s0 = inlined_call_operand.vmem [shape: bf16[512,9], index: 0, kind: input, shape index: {}]
  %s1 = inlined_call_operand.vmem [shape: bf16[9,128], index: 1, kind: input, shape index: {}]
  %s2 = inlined_call_operand.vmem [shape: f32[1,128], index: 2, kind: input, shape index: {}]
  %s3 = inlined_call_operand.vmem [shape: f32[1,128], index: 3, kind: input, shape index: {}]
  %s4 = inlined_call_operand.hbm [shape: bf16[512,128], index: 4, kind: output, shape index: {}]
  %s5 = sld [smem:[#allocation0]]
  $region49: #{tpu_custom_call.1} parent=0
    _
  %s7 = ssub.s32 1, %s5
  %s8 = scalar_select 0, %s7, %s5
  $region1: #{tpu_custom_call.1} parent=0
    #allocation2 [shape = 'u8[131072]{0}', space=vmem, size = 0x20000, scoped, tag = 'output window, operand 0']
    #allocation3 [shape = 's32[2]{0}', space=sflag, size = 0x8, scoped, tag = 'scoped memory for tpu_custom_call.1']
    %9 = vsyncpa [#allocation3], 0
    %s10 = scalar_lea.sflag [#allocation3], 1
    %11 = vsyncpa %s10, 0
    loop: start=0, step=1, limit=4
    $region2: #{tpu_custom_call.1} parent=1 // loop_pre_header
      _
    $region3: #{tpu_custom_call.1} parent=1 // loop_header
      %s13 = sphi 0, %s17
      %p14 = scmp.ge.s32.totalorder %s13, 4
      %s23 = sphi 0, %s25
      %s26 = sphi 0, %s23
      %s27 = sphi 0, %s26
      %s43 = sphi 0, %s27
      %s47 = sphi 0, %s47
      %s49 = sphi 0, %s47
      %s50 = sphi 0, %s49
      %s64 = sphi 0, %s50
      %s68 = sphi 0, %s68
      %s70 = sphi 0, %s68
      %s71 = sphi 0, %s70
      %s85 = sphi 0, %s71
      %s89 = sphi 0, %s89
      %s91 = sphi 0, %s89
      %s92 = sphi 0, %s91
      %s106 = sphi 0, %s92
      %s112 = sphi 0, %s114
      %s115 = sphi 0, %s112
      %s116 = sphi 0, %s115
      %s132 = sphi 0, %s116
    $region4: #{tpu_custom_call.1} parent=1 // loop_header_branch
      %16 = sbr.rel (%p14) target = $region8
    $region5: #{tpu_custom_call.1} parent=1 // loop_body
      %s18 = ssub.s32 %s13, 1
      %s19 = ssub.s32 %s13, 2
      %s20 = sadd.s32 %s13, 1
      %s21 = ssub.s32 %s13, %s20
      %p22 = scmp.eq.s32.totalorder %s21, 0
      %s24 = sadd.s32 %s23, 1
      %s25 = scalar_select %p22, %s23, %s24
      %p28 = pneg %p22
      %p29 = scmp.eq.s32.totalorder %s13, 1
      %p30 = por %p28, %p29
      %p31 = scmp.ne.s32.totalorder %s23, %s26
      %p32 = scmp.eq.s32.totalorder %s13, 0
      %p33 = por %p31, %p32
      %p34 = scmp.ne.s32.totalorder %s23, %s26
      %p35 = scmp.eq.s32.totalorder %s18, 1
      %p36 = por %p34, %p35
      %p37 = scmp.ne.s32.totalorder %s26, %s27
      %p38 = scmp.eq.s32.totalorder %s18, 0
      %p39 = por %p37, %p38
      %p40 = scmp.ne.s32.totalorder %s26, %s27
      %p41 = scmp.eq.s32.totalorder %s19, 1
      %p42 = por %p40, %p41
      %p44 = scmp.ne.s32.totalorder %s27, %s43
      %p45 = scmp.eq.s32.totalorder %s19, 0
      %p46 = por %p44, %p45
      %s48 = sadd.s32 %s47, 1
      %p51 = scmp.eq.s32.totalorder %s13, 1
      %p52 = scmp.ne.s32.totalorder %s47, %s49
      %p53 = scmp.eq.s32.totalorder %s13, 0
      %p54 = por %p52, %p53
      %p55 = scmp.ne.s32.totalorder %s47, %s49
      %p56 = scmp.eq.s32.totalorder %s18, 1
      %p57 = por %p55, %p56
      %p58 = scmp.ne.s32.totalorder %s49, %s50
      %p59 = scmp.eq.s32.totalorder %s18, 0
      %p60 = por %p58, %p59
      %p61 = scmp.ne.s32.totalorder %s49, %s50
      %p62 = scmp.eq.s32.totalorder %s19, 1
      %p63 = por %p61, %p62
      %p65 = scmp.ne.s32.totalorder %s50, %s64
      %p66 = scmp.eq.s32.totalorder %s19, 0
      %p67 = por %p65, %p66
      %s69 = sadd.s32 %s68, 1
      %p72 = scmp.eq.s32.totalorder %s13, 1
      %p73 = scmp.ne.s32.totalorder %s68, %s70
      %p74 = scmp.eq.s32.totalorder %s13, 0
      %p75 = por %p73, %p74
      %p76 = scmp.ne.s32.totalorder %s68, %s70
      %p77 = scmp.eq.s32.totalorder %s18, 1
      %p78 = por %p76, %p77
      %p79 = scmp.ne.s32.totalorder %s70, %s71
      %p80 = scmp.eq.s32.totalorder %s18, 0
      %p81 = por %p79, %p80
      %p82 = scmp.ne.s32.totalorder %s70, %s71
      %p83 = scmp.eq.s32.totalorder %s19, 1
      %p84 = por %p82, %p83
      %p86 = scmp.ne.s32.totalorder %s71, %s85
      %p87 = scmp.eq.s32.totalorder %s19, 0
      %p88 = por %p86, %p87
      %s90 = sadd.s32 %s89, 1
      %p93 = scmp.eq.s32.totalorder %s13, 1
      %p94 = scmp.ne.s32.totalorder %s89, %s91
      %p95 = scmp.eq.s32.totalorder %s13, 0
      %p96 = por %p94, %p95
      %p97 = scmp.ne.s32.totalorder %s89, %s91
      %p98 = scmp.eq.s32.totalorder %s18, 1
      %p99 = por %p97, %p98
      %p100 = scmp.ne.s32.totalorder %s91, %s92
      %p101 = scmp.eq.s32.totalorder %s18, 0
      %p102 = por %p100, %p101
      %p103 = scmp.ne.s32.totalorder %s91, %s92
      %p104 = scmp.eq.s32.totalorder %s19, 1
      %p105 = por %p103, %p104
      %p107 = scmp.ne.s32.totalorder %s92, %s106
      %p108 = scmp.eq.s32.totalorder %s19, 0
      %p109 = por %p107, %p108
      %s110 = ssub.s32 %s13, %s20
      %p111 = scmp.eq.s32.totalorder %s110, 0
      %s113 = sadd.s32 %s112, 1
      %s114 = scalar_select %p111, %s112, %s113
      %p117 = pneg %p111
      %p118 = scmp.eq.s32.totalorder %s13, 1
      %p119 = por %p117, %p118
      %p120 = scmp.ne.s32.totalorder %s112, %s115
      %p121 = scmp.eq.s32.totalorder %s13, 0
      %p122 = por %p120, %p121
      %p123 = scmp.ne.s32.totalorder %s112, %s115
      %p124 = scmp.eq.s32.totalorder %s18, 1
      %p125 = por %p123, %p124
      %p126 = scmp.ne.s32.totalorder %s115, %s116
      %p127 = scmp.eq.s32.totalorder %s18, 0
      %p128 = por %p126, %p127
      %p129 = scmp.ne.s32.totalorder %s115, %s116
      %p130 = scmp.eq.s32.totalorder %s19, 1
      %p131 = por %p129, %p130
      %p133 = scmp.ne.s32.totalorder %s116, %s132
      %p134 = scmp.eq.s32.totalorder %s19, 0
      %p135 = por %p133, %p134
      %p136 = scmp.le.s32.totalorder 1, %s13
      %p137 = scmp.lt.s32.totalorder %s13, 3
      %p138 = pnand %p136, %p137
      %p139 = pneg %p138
      // Predicated region
      $region9: #{tpu_custom_call.1} parent=5 // pred_check
        _
      $region10: #{tpu_custom_call.1} parent=5 // pred_check_branch
        %141 = sbr.rel (%p138) target = $region12
      $region11: #{tpu_custom_call.1} parent=5 // pred_region
        %s142 = ssub.s32 %s13, 1
        // Predicated region
        $region13: #{tpu_custom_call.1} parent=11 // pred_check
          %p143 = pneg %p60
        $region14: #{tpu_custom_call.1} parent=11 // pred_check_branch
          %145 = sbr.rel (%p143) target = $region16
        $region15: #{tpu_custom_call.1} parent=11 // pred_region
          _
        $region16: #{tpu_custom_call.1} parent=11 // pred_fallthru
          _
        // Predicated region
        $region17: #{tpu_custom_call.1} parent=11 // pred_check
          %p146 = pneg %p81
        $region18: #{tpu_custom_call.1} parent=11 // pred_check_branch
          %148 = sbr.rel (%p146) target = $region20
        $region19: #{tpu_custom_call.1} parent=11 // pred_region
          _
        $region20: #{tpu_custom_call.1} parent=11 // pred_fallthru
          _
        // Predicated region
        $region21: #{tpu_custom_call.1} parent=11 // pred_check
          %p149 = pneg %p102
        $region22: #{tpu_custom_call.1} parent=11 // pred_check_branch
          %151 = sbr.rel (%p149) target = $region24
        $region23: #{tpu_custom_call.1} parent=11 // pred_region
          _
        $region24: #{tpu_custom_call.1} parent=11 // pred_fallthru
          _
      $region12: #{tpu_custom_call.1} parent=5 // pred_fallthru
        _
      %p152 = scmp.lt.s32.totalorder %s13, 2
      // Predicated region
      $region25: #{tpu_custom_call.1} parent=5 // pred_check
        %p153 = pneg %p152
      $region26: #{tpu_custom_call.1} parent=5 // pred_check_branch
        %155 = sbr.rel (%p153) target = $region28
      $region27: #{tpu_custom_call.1} parent=5 // pred_region
        // Predicated region
        $region29: #{tpu_custom_call.1} parent=27 // pred_check
          %p156 = pneg %p33
        $region30: #{tpu_custom_call.1} parent=27 // pred_check_branch
          %158 = sbr.rel (%p156) target = $region32
        $region31: #{tpu_custom_call.1} parent=27 // pred_region
          %s159 = smul.u32 32, %s13
          %p160 = scmp.lt.s32.totalorder %s159, 63
          %s161 = scalar_select %p160, %s159, 63
          %s162 = smul.addr %s161, 4
          %s163 = scalar_lea.vmem %s0, %s162
          %s164 = smul.u32 32, %s13
        $region32: #{tpu_custom_call.1} parent=27 // pred_fallthru
          _
      $region28: #{tpu_custom_call.1} parent=5 // pred_fallthru
        _
      %p165 = scmp.le.s32.totalorder 1, %s13
      %p166 = scmp.lt.s32.totalorder %s13, 3
      %p167 = pnand %p165, %p166
      %p168 = pneg %p167
      // Predicated region
      $region33: #{tpu_custom_call.1} parent=5 // pred_check
        _
      $region34: #{tpu_custom_call.1} parent=5 // pred_check_branch
        %170 = sbr.rel (%p167) target = $region36
      $region35: #{tpu_custom_call.1} parent=5 // pred_region
        %s171 = ssub.s32 %s13, 1
        %s172 = smul.u32 32, %s18
        %p173 = scmp.lt.s32.totalorder %s172, 63
        %s174 = scalar_select %p173, %s172, 63
        %s175 = smul.addr %s174, 4
        %s176 = scalar_lea.vmem %s0, %s175
        %p177 = pneg %p39
        %p178 = pneg %p36
        %p179 = pneg %p60
        %p180 = pneg %p57
        %p181 = pneg %p81
        %p182 = pneg %p78
        %p183 = pneg %p102
        %p184 = pneg %p99
        %p185 = pneg %p128
        %p186 = pneg %p125
        %s187 = sand.u32 %s115, 1
        %s188 = scalar_lea.sflag [#allocation3], %s187
        %s189 = sand.u32 %s115, 1
        %s190 = smul.addr %s189, 128
        %s191 = scalar_lea.vmem [#allocation2], %s190
        %s192 = smul.u32 32, %s18
        %p193 = scmp.lt.s32.totalorder %s192, 63
        %s194 = scalar_select %p193, %s192, 63
        %s195 = smul.addr %s194, 4
        %s196 = scalar_lea.vmem %s0, %s195
        %s197 = smul.u32 32, %s18
        %s198 = smul.u32 32, %s18
        %v200 = vld [vmem:[%s196] sm:$0xf]
        %v201 = vld [vmem:[%s196 + $0x4] sm:$0xf]
        %v202 = vld [vmem:[%s196 + $0x8] sm:$0xf]
        %v203 = vld [vmem:[%s196 + $0xc] sm:$0xf]
        %v204 = vld [vmem:[%s196 + $0x10] sm:$0xf]
        %v205 = vld [vmem:[%s196 + $0x14] sm:$0xf]
        %v206 = vld [vmem:[%s196 + $0x18] sm:$0xf]
        %v207 = vld [vmem:[%s196 + $0x1c] sm:$0xf]
        %v208 = vld [vmem:[%s196 + $0x20] sm:$0xf]
        %v209 = vld [vmem:[%s196 + $0x24] sm:$0xf]
        %v210 = vld [vmem:[%s196 + $0x28] sm:$0xf]
        %v211 = vld [vmem:[%s196 + $0x2c] sm:$0xf]
        %v212 = vld [vmem:[%s196 + $0x30] sm:$0xf]
        %v213 = vld [vmem:[%s196 + $0x34] sm:$0xf]
        %v214 = vld [vmem:[%s196 + $0x38] sm:$0xf]
        %v215 = vld [vmem:[%s196 + $0x3c] sm:$0xf]
        %v216 = vld [vmem:[%s196 + $0x40] sm:$0xf]
        %v217 = vld [vmem:[%s196 + $0x44] sm:$0xf]
        %v218 = vld [vmem:[%s196 + $0x48] sm:$0xf]
        %v219 = vld [vmem:[%s196 + $0x4c] sm:$0xf]
        %v220 = vld [vmem:[%s196 + $0x50] sm:$0xf]
        %v221 = vld [vmem:[%s196 + $0x54] sm:$0xf]
        %v222 = vld [vmem:[%s196 + $0x58] sm:$0xf]
        %v223 = vld [vmem:[%s196 + $0x5c] sm:$0xf]
        %v224 = vld [vmem:[%s196 + $0x60] sm:$0xf]
        %v225 = vld [vmem:[%s196 + $0x64] sm:$0xf]
        %v226 = vld [vmem:[%s196 + $0x68] sm:$0xf]
        %v227 = vld [vmem:[%s196 + $0x6c] sm:$0xf]
        %v228 = vld [vmem:[%s196 + $0x70] sm:$0xf]
        %v229 = vld [vmem:[%s196 + $0x74] sm:$0xf]
        %v230 = vld [vmem:[%s196 + $0x78] sm:$0xf]
        %v231 = vld [vmem:[%s196 + $0x7c] sm:$0xf]
        %v232 = vld [vmem:[%s1] sm:$0xf]
        %v233 = vld [vmem:[%s1 + $0x4] sm:$0x1]
        %v234 = vld [vmem:[%s2] sm:$0x1]
        %v236 = vlaneseq
        %v237 = vshrl.u32 %v236, 7
        %v238 = vsub.s32 0, %v237
        %v239 = vrot.slane %v234, %v238
        %v273 = vunpack.c.l.b16 %v200
        %v274 = vunpack.c.l.b16 %v201
        %v275 = vunpack.c.l.b16 %v202
        %v276 = vunpack.c.l.b16 %v203
        %v277 = vunpack.c.l.b16 %v204
        %v278 = vunpack.c.l.b16 %v205
        %v279 = vunpack.c.l.b16 %v206
        %v280 = vunpack.c.l.b16 %v207
        %v281 = vunpack.c.l.b16 %v208
        %v282 = vunpack.c.l.b16 %v209
        %v283 = vunpack.c.l.b16 %v210
        %v284 = vunpack.c.l.b16 %v211
        %v285 = vunpack.c.l.b16 %v212
        %v286 = vunpack.c.l.b16 %v213
        %v287 = vunpack.c.l.b16 %v214
        %v288 = vunpack.c.l.b16 %v215
        %v289 = vunpack.c.l.b16 %v216
        %v290 = vunpack.c.l.b16 %v217
        %v291 = vunpack.c.l.b16 %v218
        %v292 = vunpack.c.l.b16 %v219
        %v293 = vunpack.c.l.b16 %v220
        %v294 = vunpack.c.l.b16 %v221
        %v295 = vunpack.c.l.b16 %v222
        %v296 = vunpack.c.l.b16 %v223
        %v297 = vunpack.c.l.b16 %v224
        %v298 = vunpack.c.l.b16 %v225
        %v299 = vunpack.c.l.b16 %v226
        %v300 = vunpack.c.l.b16 %v227
        %v301 = vunpack.c.l.b16 %v228
        %v302 = vunpack.c.l.b16 %v229
        %v303 = vunpack.c.l.b16 %v230
        %v304 = vunpack.c.l.b16 %v231
        %v305 = vpack.c.b16 %v274, %v273
        %v306 = vpack.c.b16 %v276, %v275
        %v307 = vpack.c.b16 %v278, %v277
        %v308 = vpack.c.b16 %v280, %v279
        %v309 = vpack.c.b16 %v282, %v281
        %v310 = vpack.c.b16 %v284, %v283
        %v311 = vpack.c.b16 %v286, %v285
        %v312 = vpack.c.b16 %v288, %v287
        %v313 = vpack.c.b16 %v290, %v289
        %v314 = vpack.c.b16 %v292, %v291
        %v315 = vpack.c.b16 %v294, %v293
        %v316 = vpack.c.b16 %v296, %v295
        %v317 = vpack.c.b16 %v298, %v297
        %v318 = vpack.c.b16 %v300, %v299
        %v319 = vpack.c.b16 %v302, %v301
        %v320 = vpack.c.b16 %v304, %v303
        %v323 = vunpack.c.l.b16 %v232
        %v324 = vunpack.c.l.b16 %v233
        %v325 = vpack.c.b16 %v324, %v323
        %vm326 = vcmask 72704
        %v328 = vsel %vm326, %v305, 0
        %v331 = vsel %vm326, %v306, 0
        %v334 = vsel %vm326, %v307, 0
        %v337 = vsel %vm326, %v308, 0
        %v340 = vsel %vm326, %v309, 0
        %v343 = vsel %vm326, %v310, 0
        %v346 = vsel %vm326, %v311, 0
        %v349 = vsel %vm326, %v312, 0
        %v352 = vsel %vm326, %v313, 0
        %v355 = vsel %vm326, %v314, 0
        %v358 = vsel %vm326, %v315, 0
        %v361 = vsel %vm326, %v316, 0
        %v364 = vsel %vm326, %v317, 0
        %v367 = vsel %vm326, %v318, 0
        %v370 = vsel %vm326, %v319, 0
        %v373 = vsel %vm326, %v320, 0
        %vm375 = vcmask 1043456
        %vm376 = vcmask 1044480
        %v377 = vsel %vm375, 4294967295, 65535
        %v378 = vsel %vm376, %v377, 0
        %v380 = vand.u32 %v325, %v378
        %382 = vmatprep.subr.bf16.mxu0 0
        %383 = vmatpush1.bf16.msra.mxu0 %v380
        %384 = vmatprep.subr.bf16.mxu0 0
        %385 = vmatpush1.bf16.msra.mxu0 0
        %386 = vmatprep.subr.bf16.mxu0 0
        %387 = vmatpush1.bf16.msra.mxu0 0
        %388 = vmatprep.subr.bf16.mxu0 0
        %389 = vmatpush1.bf16.msra.mxu0 0
        %390 = vmatprep.subr.bf16.mxu0 0
        %391 = vmatpush1.bf16.msra.mxu0 0
        %392 = vmatprep.subr.bf16.mxu0 0
        %393 = vmatpush1.bf16.msra.mxu0 0
        %394 = vmatprep.subr.bf16.mxu0 0
        %395 = vmatpush1.bf16.msra.mxu0 0
        %396 = vmatprep.subr.bf16.mxu0 0
        %397 = vmatpush1.bf16.msra.mxu0 0
        %398 = vmatprep.subr.bf16.mxu0 0
        %399 = vmatpush1.bf16.msra.mxu0 0
        %400 = vmatprep.subr.bf16.mxu0 0
        %401 = vmatpush1.bf16.msra.mxu0 0
        %402 = vmatprep.subr.bf16.mxu0 0
        %403 = vmatpush1.bf16.msra.mxu0 0
        %404 = vmatprep.subr.bf16.mxu0 0
        %405 = vmatpush1.bf16.msra.mxu0 0
        %406 = vmatprep.subr.bf16.mxu0 0
        %407 = vmatpush1.bf16.msra.mxu0 0
        %408 = vmatprep.subr.bf16.mxu0 0
        %409 = vmatpush1.bf16.msra.mxu0 0
        %410 = vmatprep.subr.bf16.mxu0 0
        %411 = vmatpush1.bf16.msra.mxu0 0
        %412 = vmatprep.subr.bf16.mxu0 0
        %413 = vmatpush1.bf16.msra.mxu0 0
        %414 = vmatprep.mubr.bf16.mxu0 0
        %415 = vmatmul.mubr.bf16.gmra.mrb[0].mxu0 %v328
        %v416 = vpop.f32.mrb[0].mxu0
        %v417 = vadd.f32 %v239, %v416
        %v418 = vpop.f32.mrb[0].mxu0
        %v419 = vpop.f32.mrb[0].mxu0
        %v420 = vadd.f32 %v239, %v419
        %v421 = vpop.f32.mrb[0].mxu0
        %422 = vmatprep.mubr.bf16.mxu0 0
        %423 = vmatmul.mubr.bf16.gmra.mrb[0].mxu0 %v331
        %v424 = vpop.f32.mrb[0].mxu0
        %v425 = vadd.f32 %v239, %v424
        %v426 = vpop.f32.mrb[0].mxu0
        %v427 = vpop.f32.mrb[0].mxu0
        %v428 = vadd.f32 %v239, %v427
        %v429 = vpop.f32.mrb[0].mxu0
        %430 = vmatprep.mubr.bf16.mxu0 0
        %431 = vmatmul.mubr.bf16.gmra.mrb[0].mxu0 %v334
        %v432 = vpop.f32.mrb[0].mxu0
        %v433 = vadd.f32 %v239, %v432
        %v434 = vpop.f32.mrb[0].mxu0
        %v435 = vpop.f32.mrb[0].mxu0
        %v436 = vadd.f32 %v239, %v435
        %v437 = vpop.f32.mrb[0].mxu0
        %438 = vmatprep.mubr.bf16.mxu0 0
        %439 = vmatmul.mubr.bf16.gmra.mrb[0].mxu0 %v337
        %v440 = vpop.f32.mrb[0].mxu0
        %v441 = vadd.f32 %v239, %v440
        %v442 = vpop.f32.mrb[0].mxu0
        %v443 = vpop.f32.mrb[0].mxu0
        %v444 = vadd.f32 %v239, %v443
        %v445 = vpop.f32.mrb[0].mxu0
        %446 = vmatprep.mubr.bf16.mxu0 0
        %447 = vmatmul.mubr.bf16.gmra.mrb[0].mxu0 %v340
        %v448 = vpop.f32.mrb[0].mxu0
        %v449 = vadd.f32 %v239, %v448
        %v450 = vpop.f32.mrb[0].mxu0
        %v451 = vpop.f32.mrb[0].mxu0
        %v452 = vadd.f32 %v239, %v451
        %v453 = vpop.f32.mrb[0].mxu0
        %454 = vmatprep.mubr.bf16.mxu0 0
        %455 = vmatmul.mubr.bf16.gmra.mrb[0].mxu0 %v343
        %v456 = vpop.f32.mrb[0].mxu0
        %v457 = vadd.f32 %v239, %v456
        %v458 = vpop.f32.mrb[0].mxu0
        %v459 = vpop.f32.mrb[0].mxu0
        %v460 = vadd.f32 %v239, %v459
        %v461 = vpop.f32.mrb[0].mxu0
        %462 = vmatprep.mubr.bf16.mxu0 0
        %463 = vmatmul.mubr.bf16.gmra.mrb[0].mxu0 %v346
        %v464 = vpop.f32.mrb[0].mxu0
        %v465 = vadd.f32 %v239, %v464
        %v466 = vpop.f32.mrb[0].mxu0
        %v467 = vpop.f32.mrb[0].mxu0
        %v468 = vadd.f32 %v239, %v467
        %v469 = vpop.f32.mrb[0].mxu0
        %470 = vmatprep.mubr.bf16.mxu0 0
        %471 = vmatmul.mubr.bf16.gmra.mrb[0].mxu0 %v349
        %v472 = vpop.f32.mrb[0].mxu0
        %v473 = vadd.f32 %v239, %v472
        %v474 = vpop.f32.mrb[0].mxu0
        %v475 = vpop.f32.mrb[0].mxu0
        %v476 = vadd.f32 %v239, %v475
        %v477 = vpop.f32.mrb[0].mxu0
        %478 = vmatprep.mubr.bf16.mxu0 0
        %479 = vmatmul.mubr.bf16.gmra.mrb[0].mxu0 %v352
        %v480 = vpop.f32.mrb[0].mxu0
        %v481 = vadd.f32 %v239, %v480
        %v482 = vpop.f32.mrb[0].mxu0
        %v483 = vpop.f32.mrb[0].mxu0
        %v484 = vadd.f32 %v239, %v483
        %v485 = vpop.f32.mrb[0].mxu0
        %486 = vmatprep.mubr.bf16.mxu0 0
        %487 = vmatmul.mubr.bf16.gmra.mrb[0].mxu0 %v355
        %v488 = vpop.f32.mrb[0].mxu0
        %v489 = vadd.f32 %v239, %v488
        %v490 = vpop.f32.mrb[0].mxu0
        %v491 = vpop.f32.mrb[0].mxu0
        %v492 = vadd.f32 %v239, %v491
        %v493 = vpop.f32.mrb[0].mxu0
        %494 = vmatprep.mubr.bf16.mxu0 0
        %495 = vmatmul.mubr.bf16.gmra.mrb[0].mxu0 %v358
        %v496 = vpop.f32.mrb[0].mxu0
        %v497 = vadd.f32 %v239, %v496
        %v498 = vpop.f32.mrb[0].mxu0
        %v499 = vpop.f32.mrb[0].mxu0
        %v500 = vadd.f32 %v239, %v499
        %v501 = vpop.f32.mrb[0].mxu0
        %502 = vmatprep.mubr.bf16.mxu0 0
        %503 = vmatmul.mubr.bf16.gmra.mrb[0].mxu0 %v361
        %v504 = vpop.f32.mrb[0].mxu0
        %v505 = vadd.f32 %v239, %v504
        %v506 = vpop.f32.mrb[0].mxu0
        %v507 = vpop.f32.mrb[0].mxu0
        %v508 = vadd.f32 %v239, %v507
        %v509 = vpop.f32.mrb[0].mxu0
        %510 = vmatprep.mubr.bf16.mxu0 0
        %511 = vmatmul.mubr.bf16.gmra.mrb[0].mxu0 %v364
        %v512 = vpop.f32.mrb[0].mxu0
        %v513 = vadd.f32 %v239, %v512
        %v514 = vpop.f32.mrb[0].mxu0
        %v515 = vpop.f32.mrb[0].mxu0
        %v516 = vadd.f32 %v239, %v515
        %v517 = vpop.f32.mrb[0].mxu0
        %518 = vmatprep.mubr.bf16.mxu0 0
        %519 = vmatmul.mubr.bf16.gmra.mrb[0].mxu0 %v367
        %v520 = vpop.f32.mrb[0].mxu0
        %v521 = vadd.f32 %v239, %v520
        %v522 = vpop.f32.mrb[0].mxu0
        %v523 = vpop.f32.mrb[0].mxu0
        %v524 = vadd.f32 %v239, %v523
        %v525 = vpop.f32.mrb[0].mxu0
        %526 = vmatprep.mubr.bf16.mxu0 0
        %527 = vmatmul.mubr.bf16.gmra.mrb[0].mxu0 %v370
        %v528 = vpop.f32.mrb[0].mxu0
        %v529 = vadd.f32 %v239, %v528
        %v530 = vpop.f32.mrb[0].mxu0
        %v531 = vpop.f32.mrb[0].mxu0
        %v532 = vadd.f32 %v239, %v531
        %v533 = vpop.f32.mrb[0].mxu0
        %534 = vmatprep.mubr.bf16.mxu0 0
        %535 = vmatmul.mubr.bf16.gmra.mrb[0].mxu0 %v373
        %v536 = vpop.f32.mrb[0].mxu0
        %v537 = vadd.f32 %v239, %v536
        %v538 = vpop.f32.mrb[0].mxu0
        %v539 = vpop.f32.mrb[0].mxu0
        %v540 = vadd.f32 %v239, %v539
        %v541 = vpop.f32.mrb[0].mxu0
        %542 = vdwg.mxu0
        %v543 = vmax.f32 %v417, 0.0
        %v544 = vmax.f32 %v420, 0.0
        %v545 = vmax.f32 %v425, 0.0
        %v546 = vmax.f32 %v428, 0.0
        %v547 = vmax.f32 %v433, 0.0
        %v548 = vmax.f32 %v436, 0.0
        %v549 = vmax.f32 %v441, 0.0
        %v550 = vmax.f32 %v444, 0.0
        %v551 = vmax.f32 %v449, 0.0
        %v552 = vmax.f32 %v452, 0.0
        %v553 = vmax.f32 %v457, 0.0
        %v554 = vmax.f32 %v460, 0.0
        %v555 = vmax.f32 %v465, 0.0
        %v556 = vmax.f32 %v468, 0.0
        %v557 = vmax.f32 %v473, 0.0
        %v558 = vmax.f32 %v476, 0.0
        %v559 = vmax.f32 %v481, 0.0
        %v560 = vmax.f32 %v484, 0.0
        %v561 = vmax.f32 %v489, 0.0
        %v562 = vmax.f32 %v492, 0.0
        %v563 = vmax.f32 %v497, 0.0
        %v564 = vmax.f32 %v500, 0.0
        %v565 = vmax.f32 %v505, 0.0
        %v566 = vmax.f32 %v508, 0.0
        %v567 = vmax.f32 %v513, 0.0
        %v568 = vmax.f32 %v516, 0.0
        %v569 = vmax.f32 %v521, 0.0
        %v570 = vmax.f32 %v524, 0.0
        %v571 = vmax.f32 %v529, 0.0
        %v572 = vmax.f32 %v532, 0.0
        %v573 = vmax.f32 %v537, 0.0
        %v574 = vmax.f32 %v540, 0.0
        %v575 = vld [vmem:[%s3] sm:$0x1]
        %v577 = vlaneseq
        %v578 = vshrl.u32 %v577, 7
        %v579 = vsub.s32 0, %v578
        %v580 = vrot.slane %v575, %v579
        %v582 = vadd.f32 %v543, %v580
        %v583 = vadd.f32 %v544, %v580
        %v584 = vadd.f32 %v545, %v580
        %v585 = vadd.f32 %v546, %v580
        %v586 = vadd.f32 %v547, %v580
        %v587 = vadd.f32 %v548, %v580
        %v588 = vadd.f32 %v549, %v580
        %v589 = vadd.f32 %v550, %v580
        %v590 = vadd.f32 %v551, %v580
        %v591 = vadd.f32 %v552, %v580
        %v592 = vadd.f32 %v553, %v580
        %v593 = vadd.f32 %v554, %v580
        %v594 = vadd.f32 %v555, %v580
        %v595 = vadd.f32 %v556, %v580
        %v596 = vadd.f32 %v557, %v580
        %v597 = vadd.f32 %v558, %v580
        %v598 = vadd.f32 %v559, %v580
        %v599 = vadd.f32 %v560, %v580
        %v600 = vadd.f32 %v561, %v580
        %v601 = vadd.f32 %v562, %v580
        %v602 = vadd.f32 %v563, %v580
        %v603 = vadd.f32 %v564, %v580
        %v604 = vadd.f32 %v565, %v580
        %v605 = vadd.f32 %v566, %v580
        %v606 = vadd.f32 %v567, %v580
        %v607 = vadd.f32 %v568, %v580
        %v608 = vadd.f32 %v569, %v580
        %v609 = vadd.f32 %v570, %v580
        %v610 = vadd.f32 %v571, %v580
        %v611 = vadd.f32 %v572, %v580
        %v612 = vadd.f32 %v573, %v580
        %v613 = vadd.f32 %v574, %v580
        %v614 = vpack.c.bf16 %v583, %v582
        %v615 = vpack.c.bf16 %v585, %v584
        %v616 = vpack.c.bf16 %v587, %v586
        %v617 = vpack.c.bf16 %v589, %v588
        %v618 = vpack.c.bf16 %v591, %v590
        %v619 = vpack.c.bf16 %v593, %v592
        %v620 = vpack.c.bf16 %v595, %v594
        %v621 = vpack.c.bf16 %v597, %v596
        %v622 = vpack.c.bf16 %v599, %v598
        %v623 = vpack.c.bf16 %v601, %v600
        %v624 = vpack.c.bf16 %v603, %v602
        %v625 = vpack.c.bf16 %v605, %v604
        %v626 = vpack.c.bf16 %v607, %v606
        %v627 = vpack.c.bf16 %v609, %v608
        %v628 = vpack.c.bf16 %v611, %v610
        %v629 = vpack.c.bf16 %v613, %v612
        %v646 = vunpack.c.l.b16 %v614
        %v647 = vunpack.c.h.b16 %v614
        %v648 = vunpack.c.l.b16 %v615
        %v649 = vunpack.c.h.b16 %v615
        %v650 = vunpack.c.l.b16 %v616
        %v651 = vunpack.c.h.b16 %v616
        %v652 = vunpack.c.l.b16 %v617
        %v653 = vunpack.c.h.b16 %v617
        %v654 = vunpack.c.l.b16 %v618
        %v655 = vunpack.c.h.b16 %v618
        %v656 = vunpack.c.l.b16 %v619
        %v657 = vunpack.c.h.b16 %v619
        %v658 = vunpack.c.l.b16 %v620
        %v659 = vunpack.c.h.b16 %v620
        %v660 = vunpack.c.l.b16 %v621
        %v661 = vunpack.c.h.b16 %v621
        %v662 = vunpack.c.l.b16 %v622
        %v663 = vunpack.c.h.b16 %v622
        %v664 = vunpack.c.l.b16 %v623
        %v665 = vunpack.c.h.b16 %v623
        %v666 = vunpack.c.l.b16 %v624
        %v667 = vunpack.c.h.b16 %v624
        %v668 = vunpack.c.l.b16 %v625
        %v669 = vunpack.c.h.b16 %v625
        %v670 = vunpack.c.l.b16 %v626
        %v671 = vunpack.c.h.b16 %v626
        %v672 = vunpack.c.l.b16 %v627
        %v673 = vunpack.c.h.b16 %v627
        %v674 = vunpack.c.l.b16 %v628
        %v675 = vunpack.c.h.b16 %v628
        %v676 = vunpack.c.l.b16 %v629
        %v677 = vunpack.c.h.b16 %v629
        %v678 = vpack.c.b16 %v646, %v646
        %v679 = vpack.c.b16 %v647, %v647
        %v680 = vpack.c.b16 %v648, %v648
        %v681 = vpack.c.b16 %v649, %v649
        %v682 = vpack.c.b16 %v650, %v650
        %v683 = vpack.c.b16 %v651, %v651
        %v684 = vpack.c.b16 %v652, %v652
        %v685 = vpack.c.b16 %v653, %v653
        %v686 = vpack.c.b16 %v654, %v654
        %v687 = vpack.c.b16 %v655, %v655
        %v688 = vpack.c.b16 %v656, %v656
        %v689 = vpack.c.b16 %v657, %v657
        %v690 = vpack.c.b16 %v658, %v658
        %v691 = vpack.c.b16 %v659, %v659
        %v692 = vpack.c.b16 %v660, %v660
        %v693 = vpack.c.b16 %v661, %v661
        %v694 = vpack.c.b16 %v662, %v662
        %v695 = vpack.c.b16 %v663, %v663
        %v696 = vpack.c.b16 %v664, %v664
        %v697 = vpack.c.b16 %v665, %v665
        %v698 = vpack.c.b16 %v666, %v666
        %v699 = vpack.c.b16 %v667, %v667
        %v700 = vpack.c.b16 %v668, %v668
        %v701 = vpack.c.b16 %v669, %v669
        %v702 = vpack.c.b16 %v670, %v670
        %v703 = vpack.c.b16 %v671, %v671
        %v704 = vpack.c.b16 %v672, %v672
        %v705 = vpack.c.b16 %v673, %v673
        %v706 = vpack.c.b16 %v674, %v674
        %v707 = vpack.c.b16 %v675, %v675
        %v708 = vpack.c.b16 %v676, %v676
        %v709 = vpack.c.b16 %v677, %v677
        %742 = vst [vmem:[%s191] sm:$0xf] %v678
        %743 = vst [vmem:[%s191 + $0x4] sm:$0xf] %v679
        %744 = vst [vmem:[%s191 + $0x8] sm:$0xf] %v680
        %745 = vst [vmem:[%s191 + $0xc] sm:$0xf] %v681
        %746 = vst [vmem:[%s191 + $0x10] sm:$0xf] %v682
        %747 = vst [vmem:[%s191 + $0x14] sm:$0xf] %v683
        %748 = vst [vmem:[%s191 + $0x18] sm:$0xf] %v684
        %749 = vst [vmem:[%s191 + $0x1c] sm:$0xf] %v685
        %750 = vst [vmem:[%s191 + $0x20] sm:$0xf] %v686
        %751 = vst [vmem:[%s191 + $0x24] sm:$0xf] %v687
        %752 = vst [vmem:[%s191 + $0x28] sm:$0xf] %v688
        %753 = vst [vmem:[%s191 + $0x2c] sm:$0xf] %v689
        %754 = vst [vmem:[%s191 + $0x30] sm:$0xf] %v690
        %755 = vst [vmem:[%s191 + $0x34] sm:$0xf] %v691
        %756 = vst [vmem:[%s191 + $0x38] sm:$0xf] %v692
        %757 = vst [vmem:[%s191 + $0x3c] sm:$0xf] %v693
        %758 = vst [vmem:[%s191 + $0x40] sm:$0xf] %v694
        %759 = vst [vmem:[%s191 + $0x44] sm:$0xf] %v695
        %760 = vst [vmem:[%s191 + $0x48] sm:$0xf] %v696
        %761 = vst [vmem:[%s191 + $0x4c] sm:$0xf] %v697
        %762 = vst [vmem:[%s191 + $0x50] sm:$0xf] %v698
        %763 = vst [vmem:[%s191 + $0x54] sm:$0xf] %v699
        %764 = vst [vmem:[%s191 + $0x58] sm:$0xf] %v700
        %765 = vst [vmem:[%s191 + $0x5c] sm:$0xf] %v701
        %766 = vst [vmem:[%s191 + $0x60] sm:$0xf] %v702
        %767 = vst [vmem:[%s191 + $0x64] sm:$0xf] %v703
        %768 = vst [vmem:[%s191 + $0x68] sm:$0xf] %v704
        %769 = vst [vmem:[%s191 + $0x6c] sm:$0xf] %v705
        %770 = vst [vmem:[%s191 + $0x70] sm:$0xf] %v706
        %771 = vst [vmem:[%s191 + $0x74] sm:$0xf] %v707
        %772 = vst [vmem:[%s191 + $0x78] sm:$0xf] %v708
        %773 = vst [vmem:[%s191 + $0x7c] sm:$0xf] %v709
        %s774 = sand.u32 %s115, 1
        %s775 = scalar_lea.sflag [#allocation3], %s774
        %s776 = sand.u32 %s115, 1
        %s777 = smul.addr %s776, 128
        %s778 = scalar_lea.vmem [#allocation2], %s777
        // Predicated region
        $region37: #{tpu_custom_call.1} parent=35 // pred_check
          %p779 = pneg %p125
        $region38: #{tpu_custom_call.1} parent=35 // pred_check_branch
          %781 = sbr.rel (%p779) target = $region40
        $region39: #{tpu_custom_call.1} parent=35 // pred_region
          %s782 = smul.u32 32, %s18
          %s784 = ssub.s32 2048, 2048
          %785 = vsyncadd %s775, %s784
          %s786 = smul.addr %s782, 64
          %s787 = scalar_lea.hbm %s4, %s786
          %s788 = sshll.u32 %s778, 4
          %s789 = int_to_ptr.vmem [resolvable:$true] %s788
          %794 = dma.vmem_to_hbm [thread:$0]  %s789, 2048, %s787, %s775, 64, 64, 4
        $region40: #{tpu_custom_call.1} parent=35 // pred_fallthru
          _
      $region36: #{tpu_custom_call.1} parent=5 // pred_fallthru
        _
      %p795 = scmp.le.s32.totalorder 2, %s13
      // Predicated region
      $region41: #{tpu_custom_call.1} parent=5 // pred_check
        %p796 = pneg %p795
      $region42: #{tpu_custom_call.1} parent=5 // pred_check_branch
        %798 = sbr.rel (%p796) target = $region44
      $region43: #{tpu_custom_call.1} parent=5 // pred_region
        %s799 = ssub.s32 %s13, 2
        // Predicated region
        $region45: #{tpu_custom_call.1} parent=43 // pred_check
          %p800 = pneg %p131
        $region46: #{tpu_custom_call.1} parent=43 // pred_check_branch
          %802 = sbr.rel (%p800) target = $region48
        $region47: #{tpu_custom_call.1} parent=43 // pred_region
          %s803 = sand.u32 %s116, 1
          %s804 = scalar_lea.sflag [#allocation3], %s803
          %s805 = sand.u32 %s116, 1
          %s806 = smul.addr %s805, 128
          %s807 = scalar_lea.vmem [#allocation2], %s806
          %808 = dma.done %s804, 2048
        $region48: #{tpu_custom_call.1} parent=43 // pred_fallthru
          _
      $region44: #{tpu_custom_call.1} parent=5 // pred_fallthru
        _
    $region6: #{tpu_custom_call.1} parent=1 // loop_footer
      %s17 = sadd.s32 1, %s13
    $region7: #{tpu_custom_call.1} parent=1 // loop_footer_branch
      %12 = sbr.rel target = $region3
    $region8: #{tpu_custom_call.1} parent=1 // loop_exit
      _
    %809 = vsyncpa [#allocation3], 1
    %s810 = scalar_lea.sflag [#allocation3], 1
    %811 = vsyncpa %s810, 1

</llo_original>
